<compile_context>
chip_gen: v7x
topology: tpu7x:2x2x1
jax: 0.10.0
libtpu: 0.0.40
codegen_flags: <defaults>
</compile_context>

<pallas_src>
import jax
import jax.numpy as jnp
from jax.experimental import pallas as pl
from jax.experimental.pallas import tpu as pltpu

_LANE = 128


def _mul_kernel(scale_ref, x_ref, o_ref):
    s = scale_ref[0, 0]  # f32 scalar in SMEM
    if jnp.issubdtype(x_ref.dtype, jnp.floating):
        # Multiply in the input dtype: no f32 unpack/repack for sub-32-bit types.
        o_ref[...] = x_ref[...] * s.astype(x_ref.dtype)
    else:
        # Integer inputs: compute in f32, cast back to the input dtype.
        # TODO(synk): PyTorch would type-promote int * float to a float tensor;
        # we keep the input dtype so the output buffer dtype matches the input.
        o_ref[...] = (x_ref[...].astype(jnp.float32) * s).astype(o_ref.dtype)


def _sublanes_for(dtype):
    return {4: 8, 2: 16, 1: 32}.get(jnp.dtype(dtype).itemsize, 8)


def _cdiv(a, b):
    return -(-a // b)


def _round_up(a, b):
    return _cdiv(a, b) * b


def mul_pallas(x, scale):
    """Compute x * scale with a Pallas TPU kernel. Works for any input shape."""
    orig_shape = x.shape
    dtype = x.dtype
    n = x.size
    itemsize = jnp.dtype(dtype).itemsize
    sub = _sublanes_for(dtype)

    def _jax_fallback():
        # Tiny / pathological shapes: a kernel launch costs more than the op.
        return (x.astype(jnp.float32) * jnp.float32(scale)).astype(dtype)

    if n == 0 or n < sub * _LANE:
        return _jax_fallback()

    flat = x.reshape(-1)  # free reshape for a contiguous array (no HBM pass)

    if n % _LANE == 0:
        # Lane-dense view: widest column count dividing n that still leaves at
        # least one full sublane group of rows.
        cols = _LANE
        for cand in (2048, 1024, 512, 256, 128):
            if n % cand == 0 and (n // cand) >= sub:
                cols = cand
                break
        rows = n // cols
    else:
        # Lane-ragged total: keep the original trailing dim as the full-extent
        # lane dimension of every block. Pallas masks the partial last row
        # block, so there is no extra HBM pass for the tail.
        cols = orig_shape[-1] if x.ndim >= 2 else n
        rows = n // cols

    x2d = flat.reshape(rows, cols)

    # ~4 MiB per block buffer (per perf review), double-buffered in + out.
    target_block_bytes = 4 * 1024 * 1024
    row_bytes = cols * itemsize
    block_rows = target_block_bytes // row_bytes
    if block_rows >= rows:
        block_rows = rows  # single block: equals the full dim (always legal)
    else:
        block_rows = max(sub, (block_rows // sub) * sub)

    # v7x two-TensorCore balance: prefer >= 2 grid steps, and an even count
    # when the step count is small and odd.
    steps = _cdiv(rows, block_rows)
    if steps == 1 and rows >= 2 * sub:
        block_rows = _round_up(_cdiv(rows, 2), sub)
        steps = _cdiv(rows, block_rows)
    if 2 < steps < 16 and steps % 2 == 1:
        cand = _round_up(_cdiv(rows, steps + 1), sub)
        if cand >= sub and _cdiv(rows, cand) % 2 == 0:
            block_rows = cand
            steps = _cdiv(rows, cand)

    block_bytes = block_rows * cols * itemsize
    vmem_needed = 4 * block_bytes + (4 << 20)  # 2x in + 2x out + headroom
    if vmem_needed > (64 << 20):
        # Enormous un-tileable trailing dim; punt to XLA.
        # TODO(synk): could be handled with a manual-DMA 1D kernel if needed.
        return _jax_fallback()
    vmem_limit = int(max(32 << 20, vmem_needed))

    scale_arr = jnp.full((1, 1), scale, dtype=jnp.float32)

    out2d = pl.pallas_call(
        _mul_kernel,
        out_shape=jax.ShapeDtypeStruct((rows, cols), dtype),
        grid_spec=pltpu.PrefetchScalarGridSpec(
            num_scalar_prefetch=0,
            grid=(steps,),
            in_specs=[
                pl.BlockSpec(memory_space=pltpu.MemorySpace.SMEM),    # scale (1,1)
                pl.BlockSpec((block_rows, cols), lambda i: (i, 0)),   # x tile
            ],
            out_specs=pl.BlockSpec((block_rows, cols), lambda i: (i, 0)),
        ),
        compiler_params=pltpu.CompilerParams(
            dimension_semantics=("parallel",),
            vmem_limit_bytes=vmem_limit,
        ),
        cost_estimate=pl.CostEstimate(
            flops=n, transcendentals=0, bytes_accessed=2 * n * itemsize),
    )(scale_arr, x2d)

    return out2d.reshape(orig_shape)


if __name__ == "__main__":
    key = jax.random.PRNGKey(0)
    # Small NCHW-style input consistent with typical conv-net usage.
    x = jax.random.normal(key, (2, 4, 16, 16), dtype=jnp.float32)
    scale = 0.5  # the module's __init__ scale parameter (deterministic)

    out = mul_pallas(x, scale)
    jax.block_until_ready(out)

    # Correctness check against plain JAX reference.
    expected = x * scale
    assert out.shape == x.shape
    assert out.dtype == x.dtype
    assert jnp.allclose(out, expected, atol=1e-6, rtol=1e-6)

    print("KERNEL_OK")
</pallas_src>

<mosaic_0001>
module attributes {stable_mosaic.version = 11 : i64} {
  func.func @_mul_kernel(%arg0: i32, %arg1: memref<1x1xf32, #tpu.memory_space<smem>>, %arg2: memref<8x256xf32, #tpu.memory_space<vmem>>, %arg3: memref<8x256xf32, #tpu.memory_space<vmem>>) attributes {dimension_semantics = [#tpu.dimension_semantics<parallel>], iteration_bounds = array<i64: 1>, scalar_prefetch = 0 : i64, scratch_operands = 0 : i64, tpu.core_type = #tpu.core_type<tc>, window_params = [{transform_indices = @transform_0, window_bounds = array<i64: 1, 1>}, {transform_indices = @transform_1, window_bounds = array<i64: 8, 256>}, {transform_indices = @transform_2, window_bounds = array<i64: 8, 256>}]} {
    %c0 = arith.constant 0 : index
    %c0_0 = arith.constant 0 : index
    %0 = memref.load %arg1[%c0, %c0_0] : memref<1x1xf32, #tpu.memory_space<smem>>
    %c0_1 = arith.constant 0 : index
    %c0_2 = arith.constant 0 : index
    %1 = vector.load %arg2[%c0_1, %c0_2] : memref<8x256xf32, #tpu.memory_space<vmem>>, vector<8x256xf32>
    %2 = vector.broadcast %0 : f32 to vector<8x256xf32>
    %3 = arith.mulf %1, %2 : vector<8x256xf32>
    %c0_3 = arith.constant 0 : index
    %c0_4 = arith.constant 0 : index
    %4 = vector.load %arg3[%c0_3, %c0_4] : memref<8x256xf32, #tpu.memory_space<vmem>>, vector<8x256xf32>
    tpu.vector_store %arg3[%c0_3, %c0_4], %3 {strides = array<i32>} : memref<8x256xf32, #tpu.memory_space<vmem>>, vector<8x256xf32>,
    return
  }
  func.func @transform_0(%arg0: i32) -> (i32, i32) {
    %c0_i32 = arith.constant 0 : i32
    %c0_i32_0 = arith.constant 0 : i32
    %c0_i32_1 = arith.constant 0 : i32
    return %c0_i32, %c0_i32_0 : i32, i32
  }
  func.func @transform_1(%arg0: i32) -> (i32, i32) {
    %c0_i32 = arith.constant 0 : i32
    %c0_i32_0 = arith.constant 0 : i32
    return %arg0, %c0_i32 : i32, i32
  }
  func.func @transform_2(%arg0: i32) -> (i32, i32) {
    %c0_i32 = arith.constant 0 : i32
    %c0_i32_0 = arith.constant 0 : i32
    return %arg0, %c0_i32 : i32, i32
  }
}

</mosaic_0001>

<llo_original>
// kernel: tpu_custom_call.1
$region0: #{tpu_custom_call.1}
  #allocation0 [shape = 'u32[]', space=smem, size = 0x4, offset = 0x4, fixed_abs, tag = 'smem constant byte address 0x4 - core index']
  #allocation1 [shape = 'u32[144,128]{1,0:T(1,128)}', space=vmem, size = 0x12000, scoped, tag = 'internal scratch']
  #allocation2 [shape = 'f32[1,1]{1,0:T(1,128)S(6)}', space=smem, size = 0x200, scoped, tag = 'scoped memory for tpu_custom_call.1']
  %s0 = inlined_call_operand.<no memory space> [shape: f32[1,1], index: 0, kind: input, shape index: {}]
  %s1 = inlined_call_operand.hbm [shape: f32[8,256], index: 1, kind: input, shape index: {}]
  %s2 = inlined_call_operand.hbm [shape: f32[8,256], index: 2, kind: output, shape index: {}]
  %s3 = sld [smem:[#allocation0]]
  $region22: #{tpu_custom_call.1} parent=0
    _
  %s5 = ssub.s32 1, %s3
  %s6 = scalar_select 0, %s5, %s3
  %7 = sst [smem:[#allocation2]] %s0
  $region1: #{tpu_custom_call.1} parent=0
    #allocation3 [shape = 'u8[8192]{0}', space=vmem, size = 0x2000, scoped, tag = 'input window, operand 1, single buffered']
    #allocation4 [shape = 's32[1]{0}', space=sflag, size = 0x4, scoped, tag = 'scoped memory for tpu_custom_call.1']
    #allocation5 [shape = 's32[1]{0}', space=sflag, size = 0x4, scoped, tag = 'scoped memory for tpu_custom_call.1']
    #allocation6 [shape = 'u8[8192]{0}', space=vmem, size = 0x2000, scoped, tag = 'output window, operand 0, single buffered']
    %8 = vsyncpa [#allocation4], 0
    %9 = vsyncpa [#allocation5], 0
    // Predicated region
    $region2: #{tpu_custom_call.1} parent=1 // pred_check
      _
    $region3: #{tpu_custom_call.1} parent=1 // pred_check_branch
      %11 = sbr.rel (0) target = $region5
    $region4: #{tpu_custom_call.1} parent=1 // pred_region
      _
    $region5: #{tpu_custom_call.1} parent=1 // pred_fallthru
      _
    // Predicated region
    $region6: #{tpu_custom_call.1} parent=1 // pred_check
      _
    $region7: #{tpu_custom_call.1} parent=1 // pred_check_branch
      %13 = sbr.rel (0) target = $region9
    $region8: #{tpu_custom_call.1} parent=1 // pred_region
      %s15 = ssub.s32 256, 256
      %16 = vsyncadd [#allocation4], %s15
      %s18 = sshll.u32 [#allocation3], 4
      %s19 = int_to_ptr.vmem [resolvable:$true] %s18
      %21 = dma.hbm_to_vmem [thread:$0]  %s1, 256, %s19, [#allocation4]
    $region9: #{tpu_custom_call.1} parent=1 // pred_fallthru
      _
    // Predicated region
    $region10: #{tpu_custom_call.1} parent=1 // pred_check
      _
    $region11: #{tpu_custom_call.1} parent=1 // pred_check_branch
      %23 = sbr.rel (0) target = $region13
    $region12: #{tpu_custom_call.1} parent=1 // pred_region
      %24 = dma.done [#allocation4], 256
    $region13: #{tpu_custom_call.1} parent=1 // pred_fallthru
      _
    %s25 = sld [smem:[#allocation2]]
    %v26 = vld [vmem:[#allocation3] sm:$0xff]
    %v27 = vld [vmem:[#allocation3 + $0x8] sm:$0xff]
    %v28 = vstv %s25
    %v29 = vmul.f32 %v26, %v28
    %v30 = vmul.f32 %v27, %v28
    %31 = vst [vmem:[#allocation6] sm:$0xff] %v29
    %32 = vst [vmem:[#allocation6 + $0x8] sm:$0xff] %v30
    // Predicated region
    $region14: #{tpu_custom_call.1} parent=1 // pred_check
      _
    $region15: #{tpu_custom_call.1} parent=1 // pred_check_branch
      %34 = sbr.rel (0) target = $region17
    $region16: #{tpu_custom_call.1} parent=1 // pred_region
      %s36 = ssub.s32 256, 256
      %37 = vsyncadd [#allocation5], %s36
      %s39 = sshll.u32 [#allocation6], 4
      %s40 = int_to_ptr.vmem [resolvable:$true] %s39
      %42 = dma.vmem_to_hbm [thread:$0]  %s40, 256, %s2, [#allocation5]
    $region17: #{tpu_custom_call.1} parent=1 // pred_fallthru
      _
    // Predicated region
    $region18: #{tpu_custom_call.1} parent=1 // pred_check
      _
    $region19: #{tpu_custom_call.1} parent=1 // pred_check_branch
      %44 = sbr.rel (0) target = $region21
    $region20: #{tpu_custom_call.1} parent=1 // pred_region
      %45 = dma.done [#allocation5], 256
    $region21: #{tpu_custom_call.1} parent=1 // pred_fallthru
      _
    %46 = vsyncpa [#allocation4], 1
    %47 = vsyncpa [#allocation5], 1

</llo_original>
